<compile_context>
chip_gen: v7x
topology: tpu7x:2x2x1
jax: 0.10.0
libtpu: 0.0.40
codegen_flags: <defaults>
</compile_context>

<pallas_src>
import jax
import jax.numpy as jnp
from jax.experimental import pallas as pl
from jax.experimental.pallas import tpu as pltpu


def pointcnn_kernel(x_ref, wc_ref, bc_ref, wf1_ref, bf1_ref, wf2_ref, bf2_ref,
                    o_ref):
    # x_ref: (BB, N, 3) points for BB batch elements.

    # Global average pool over the N points (AdaptiveAvgPool2d((1,1))).
    # Pooling is linear, so it commutes with the folded (activation-free)
    # conv stack -> pool first, then one tiny (BB,3)@(3,256) matmul.
    g = jnp.mean(x_ref[...], axis=1)                                   # (BB, 3)

    # Folded xconv1/xconv2/xconv3 (1x1 convs with no nonlinearity between).
    feat = jnp.dot(g, wc_ref[...], preferred_element_type=jnp.float32)
    feat = feat + bc_ref[...]                                          # (BB, 256)

    # fc_layers: Linear(256,128) -> ReLU -> Linear(128, C_pad)
    f = jnp.dot(feat, wf1_ref[...], preferred_element_type=jnp.float32)
    f = jnp.maximum(f + bf1_ref[...], 0.0)                             # (BB, 128)
    out = jnp.dot(f, wf2_ref[...], preferred_element_type=jnp.float32)
    out = out + bf2_ref[...]                                           # (BB, C_pad)

    o_ref[...] = out.astype(o_ref.dtype)                # lane-dense (BB, C_pad)


def pointcnn_forward(x, params, *, block_b=None):
    """x: (B, N, 3) float32.  params: dict of transposed weights/biases."""
    B, N, _ = x.shape
    num_classes = params["wf2"].shape[1]

    # --- fold the activation-free conv stack in the wrapper (tiny XLA ops) ---
    w_eff = params["w1"] @ params["w2"] @ params["w3"]                  # (3, 256)
    b_eff = ((params["b1"] @ params["w2"] + params["b2"]) @ params["w3"]
             + params["b3"])                                            # (1, 256)

    # --- lane-dense classifier: pad num_classes up to a multiple of 128 ------
    c_pad = 128 * pl.cdiv(num_classes, 128)
    wf2_p = jnp.zeros((params["wf2"].shape[0], c_pad), jnp.float32)
    wf2_p = wf2_p.at[:, :num_classes].set(params["wf2"])
    bf2_p = jnp.zeros((1, c_pad), jnp.float32)
    bf2_p = bf2_p.at[:, :num_classes].set(params["bf2"])

    # --- batch blocking: BB elements per grid step ----------------------------
    if block_b is None:
        block_b = B if B <= 8 else 8        # small B: one step; large B: BB=8
    pad_b = (-B) % block_b
    if pad_b:
        x = jnp.concatenate([x, jnp.zeros((pad_b, N, 3), x.dtype)], axis=0)
    b_total = B + pad_b
    grid = (b_total // block_b,)

    def const2d(shape):
        # Constant index_map: weight/bias blocks are identical for every step.
        return pl.BlockSpec(shape, lambda b: (0, 0))

    in_specs = [
        pl.BlockSpec((block_b, N, 3), lambda b: (b, 0, 0)),   # points
        const2d(w_eff.shape),  const2d(b_eff.shape),          # folded conv
        const2d(params["wf1"].shape), const2d(params["bf1"].shape),
        const2d(wf2_p.shape),  const2d(bf2_p.shape),
    ]

    out = pl.pallas_call(
        pointcnn_kernel,
        out_shape=jax.ShapeDtypeStruct((b_total, c_pad), jnp.float32),
        grid_spec=pltpu.PrefetchScalarGridSpec(
            num_scalar_prefetch=0,
            grid=grid,
            in_specs=in_specs,
            out_specs=pl.BlockSpec((block_b, c_pad), lambda b: (b, 0)),
        ),
        compiler_params=pltpu.CompilerParams(
            dimension_semantics=("parallel",)),   # shards across TCs on v7x
    )(x, w_eff, b_eff, params["wf1"], params["bf1"], wf2_p, bf2_p)

    return out[:B, :num_classes]


def init_params(key, num_classes):
    """Deterministic synthetic parameters with the shapes implied by __init__.

    Conv2d(in, out, 1, 1).weight: (out, in, 1, 1) -> stored here as (in, out).
    Linear(in, out).weight:       (out, in)       -> stored here as (in, out).
    Biases stored as (1, out) for 2-D VMEM friendliness.
    """
    ks = jax.random.split(key, 10)

    def w(k, fan_in, fan_out):
        bound = 1.0 / jnp.sqrt(fan_in)
        return jax.random.uniform(k, (fan_in, fan_out), jnp.float32, -bound, bound)

    def b(k, fan_in, fan_out):
        bound = 1.0 / jnp.sqrt(fan_in)
        return jax.random.uniform(k, (1, fan_out), jnp.float32, -bound, bound)

    return {
        "w1":  w(ks[0], 3, 64),     "b1":  b(ks[1], 3, 64),
        "w2":  w(ks[2], 64, 128),   "b2":  b(ks[3], 64, 128),
        "w3":  w(ks[4], 128, 256),  "b3":  b(ks[5], 128, 256),
        "wf1": w(ks[6], 256, 128),  "bf1": b(ks[7], 256, 128),
        "wf2": w(ks[8], 128, num_classes), "bf2": b(ks[9], 128, num_classes),
    }


def reference_forward(x, params):
    """Pure-JAX reference matching the PyTorch forward (unfused form)."""
    h = x @ params["w1"] + params["b1"]
    h = h @ params["w2"] + params["b2"]
    h = h @ params["w3"] + params["b3"]
    g = jnp.mean(h, axis=1)                          # (B, 256)
    f = jnp.maximum(g @ params["wf1"] + params["bf1"], 0.0)
    return f @ params["wf2"] + params["bf2"]


if __name__ == "__main__":
    key = jax.random.PRNGKey(0)
    k_x, k_p = jax.random.split(key)

    B, N, num_classes = 2, 16, 10          # small: 2 batches, 16 points, 3 coords
    x = jax.random.normal(k_x, (B, N, 3), jnp.float32)
    params = init_params(k_p, num_classes)

    out = jax.block_until_ready(pointcnn_forward(x, params))

    ref = reference_forward(x, params)
    assert out.shape == (B, num_classes)
    assert jnp.allclose(out, ref, atol=1e-4, rtol=1e-4), "mismatch vs reference"

    print("KERNEL_OK")
</pallas_src>

<mosaic_0001>
module attributes {stable_mosaic.version = 11 : i64} {
  func.func @pointcnn_kernel(%arg0: i32, %arg1: memref<2x16x3xf32, #tpu.memory_space<vmem>>, %arg2: memref<3x256xf32, #tpu.memory_space<vmem>>, %arg3: memref<1x256xf32, #tpu.memory_space<vmem>>, %arg4: memref<256x128xf32, #tpu.memory_space<vmem>>, %arg5: memref<1x128xf32, #tpu.memory_space<vmem>>, %arg6: memref<128x128xf32, #tpu.memory_space<vmem>>, %arg7: memref<1x128xf32, #tpu.memory_space<vmem>>, %arg8: memref<2x128xf32, #tpu.memory_space<vmem>>) attributes {dimension_semantics = [#tpu.dimension_semantics<parallel>], iteration_bounds = array<i64: 1>, scalar_prefetch = 0 : i64, scratch_operands = 0 : i64, tpu.core_type = #tpu.core_type<tc>, window_params = [{transform_indices = @transform_0, window_bounds = array<i64: 2, 16, 3>}, {pipeline_mode = #tpu.pipeline_mode<synchronous>, transform_indices = @transform_1, window_bounds = array<i64: 3, 256>}, {pipeline_mode = #tpu.pipeline_mode<synchronous>, transform_indices = @transform_2, window_bounds = array<i64: 1, 256>}, {pipeline_mode = #tpu.pipeline_mode<synchronous>, transform_indices = @transform_3, window_bounds = array<i64: 256, 128>}, {pipeline_mode = #tpu.pipeline_mode<synchronous>, transform_indices = @transform_4, window_bounds = array<i64: 1, 128>}, {pipeline_mode = #tpu.pipeline_mode<synchronous>, transform_indices = @transform_5, window_bounds = array<i64: 128, 128>}, {pipeline_mode = #tpu.pipeline_mode<synchronous>, transform_indices = @transform_6, window_bounds = array<i64: 1, 128>}, {transform_indices = @transform_7, window_bounds = array<i64: 2, 128>}]} {
    %c0 = arith.constant 0 : index
    %c0_0 = arith.constant 0 : index
    %c0_1 = arith.constant 0 : index
    %0 = vector.load %arg1[%c0, %c0_0, %c0_1] : memref<2x16x3xf32, #tpu.memory_space<vmem>>, vector<2x16x3xf32>
    %cst = arith.constant dense<0.000000e+00> : vector<2x3xf32>
    %1 = vector.multi_reduction <add>, %0, %cst [1] : vector<2x16x3xf32> to vector<2x3xf32>
    %cst_2 = arith.constant 1.600000e+01 : f32
    %2 = vector.broadcast %cst_2 : f32 to vector<2x3xf32>
    %3 = arith.divf %1, %2 : vector<2x3xf32>
    %c0_3 = arith.constant 0 : index
    %c0_4 = arith.constant 0 : index
    %4 = vector.load %arg2[%c0_3, %c0_4] : memref<3x256xf32, #tpu.memory_space<vmem>>, vector<3x256xf32>
    %cst_5 = arith.constant dense<0.000000e+00> : vector<2x256xf32>
    %5 = tpu.matmul %3, %4, %cst_5 {dimension_numbers = #tpu.dot_dimension_numbers<[1], [0], [0], [1], [0, 0, 1, 1], [], []>} : vector<2x3xf32>, vector<3x256xf32>, vector<2x256xf32> -> vector<2x256xf32>
    %c0_6 = arith.constant 0 : index
    %c0_7 = arith.constant 0 : index
    %6 = vector.load %arg3[%c0_6, %c0_7] : memref<1x256xf32, #tpu.memory_space<vmem>>, vector<1x256xf32>
    %7 = vector.broadcast %6 : vector<1x256xf32> to vector<2x256xf32>
    %8 = arith.addf %5, %7 : vector<2x256xf32>
    %c0_8 = arith.constant 0 : index
    %c0_9 = arith.constant 0 : index
    %9 = vector.load %arg4[%c0_8, %c0_9] : memref<256x128xf32, #tpu.memory_space<vmem>>, vector<256x128xf32>
    %cst_10 = arith.constant dense<0.000000e+00> : vector<2x128xf32>
    %10 = tpu.matmul %8, %9, %cst_10 {dimension_numbers = #tpu.dot_dimension_numbers<[1], [0], [0], [1], [0, 0, 1, 1], [], []>} : vector<2x256xf32>, vector<256x128xf32>, vector<2x128xf32> -> vector<2x128xf32>
    %c0_11 = arith.constant 0 : index
    %c0_12 = arith.constant 0 : index
    %11 = vector.load %arg5[%c0_11, %c0_12] : memref<1x128xf32, #tpu.memory_space<vmem>>, vector<1x128xf32>
    %12 = vector.broadcast %11 : vector<1x128xf32> to vector<2x128xf32>
    %13 = arith.addf %10, %12 : vector<2x128xf32>
    %cst_13 = arith.constant 0.000000e+00 : f32
    %14 = vector.broadcast %cst_13 : f32 to vector<2x128xf32>
    %15 = arith.maximumf %13, %14 : vector<2x128xf32>
    %c0_14 = arith.constant 0 : index
    %c0_15 = arith.constant 0 : index
    %16 = vector.load %arg6[%c0_14, %c0_15] : memref<128x128xf32, #tpu.memory_space<vmem>>, vector<128x128xf32>
    %cst_16 = arith.constant dense<0.000000e+00> : vector<2x128xf32>
    %17 = tpu.matmul %15, %16, %cst_16 {dimension_numbers = #tpu.dot_dimension_numbers<[1], [0], [0], [1], [0, 0, 1, 1], [], []>} : vector<2x128xf32>, vector<128x128xf32>, vector<2x128xf32> -> vector<2x128xf32>
    %c0_17 = arith.constant 0 : index
    %c0_18 = arith.constant 0 : index
    %18 = vector.load %arg7[%c0_17, %c0_18] : memref<1x128xf32, #tpu.memory_space<vmem>>, vector<1x128xf32>
    %19 = vector.broadcast %18 : vector<1x128xf32> to vector<2x128xf32>
    %20 = arith.addf %17, %19 : vector<2x128xf32>
    %c0_19 = arith.constant 0 : index
    %c0_20 = arith.constant 0 : index
    %21 = vector.load %arg8[%c0_19, %c0_20] : memref<2x128xf32, #tpu.memory_space<vmem>>, vector<2x128xf32>
    tpu.vector_store %arg8[%c0_19, %c0_20], %20 {strides = array<i32>} : memref<2x128xf32, #tpu.memory_space<vmem>>, vector<2x128xf32>,
    return
  }
  func.func @transform_0(%arg0: i32) -> (i32, i32, i32) {
    %c0_i32 = arith.constant 0 : i32
    %c0_i32_0 = arith.constant 0 : i32
    %c0_i32_1 = arith.constant 0 : i32
    return %arg0, %c0_i32, %c0_i32_0 : i32, i32, i32
  }
  func.func @transform_1(%arg0: i32) -> (i32, i32) {
    %c0_i32 = arith.constant 0 : i32
    %c0_i32_0 = arith.constant 0 : i32
    %c0_i32_1 = arith.constant 0 : i32
    return %c0_i32, %c0_i32_0 : i32, i32
  }
  func.func @transform_2(%arg0: i32) -> (i32, i32) {
    %c0_i32 = arith.constant 0 : i32
    %c0_i32_0 = arith.constant 0 : i32
    %c0_i32_1 = arith.constant 0 : i32
    return %c0_i32, %c0_i32_0 : i32, i32
  }
  func.func @transform_3(%arg0: i32) -> (i32, i32) {
    %c0_i32 = arith.constant 0 : i32
    %c0_i32_0 = arith.constant 0 : i32
    %c0_i32_1 = arith.constant 0 : i32
    return %c0_i32, %c0_i32_0 : i32, i32
  }
  func.func @transform_4(%arg0: i32) -> (i32, i32) {
    %c0_i32 = arith.constant 0 : i32
    %c0_i32_0 = arith.constant 0 : i32
    %c0_i32_1 = arith.constant 0 : i32
    return %c0_i32, %c0_i32_0 : i32, i32
  }
  func.func @transform_5(%arg0: i32) -> (i32, i32) {
    %c0_i32 = arith.constant 0 : i32
    %c0_i32_0 = arith.constant 0 : i32
    %c0_i32_1 = arith.constant 0 : i32
    return %c0_i32, %c0_i32_0 : i32, i32
  }
  func.func @transform_6(%arg0: i32) -> (i32, i32) {
    %c0_i32 = arith.constant 0 : i32
    %c0_i32_0 = arith.constant 0 : i32
    %c0_i32_1 = arith.constant 0 : i32
    return %c0_i32, %c0_i32_0 : i32, i32
  }
  func.func @transform_7(%arg0: i32) -> (i32, i32) {
    %c0_i32 = arith.constant 0 : i32
    %c0_i32_0 = arith.constant 0 : i32
    return %arg0, %c0_i32 : i32, i32
  }
}

</mosaic_0001>

<llo_original>
// kernel: tpu_custom_call.1
$region0: #{tpu_custom_call.1}
  #allocation0 [shape = 'u32[]', space=smem, size = 0x4, offset = 0x4, fixed_abs, tag = 'smem constant byte address 0x4 - core index']
  #allocation1 [shape = 'u32[144,128]{1,0:T(1,128)}', space=vmem, size = 0x12000, scoped, tag = 'internal scratch']
  %s0 = inlined_call_operand.vmem [shape: f32[2,16,3], index: 0, kind: input, shape index: {}]
  %s1 = inlined_call_operand.vmem [shape: f32[3,256], index: 1, kind: input, shape index: {}]
  %s2 = inlined_call_operand.vmem [shape: f32[1,256], index: 2, kind: input, shape index: {}]
  %s3 = inlined_call_operand.hbm [shape: f32[256,128], index: 3, kind: input, shape index: {}]
  %s4 = inlined_call_operand.vmem [shape: f32[1,128], index: 4, kind: input, shape index: {}]
  %s5 = inlined_call_operand.hbm [shape: f32[128,128], index: 5, kind: input, shape index: {}]
  %s6 = inlined_call_operand.vmem [shape: f32[1,128], index: 6, kind: input, shape index: {}]
  %s7 = inlined_call_operand.hbm [shape: f32[2,128], index: 7, kind: output, shape index: {}]
  %s8 = sld [smem:[#allocation0]]
  $region46: #{tpu_custom_call.1} parent=0
    _
  %s10 = ssub.s32 1, %s8
  %s11 = scalar_select 0, %s10, %s8
  $region1: #{tpu_custom_call.1} parent=0
    #allocation2 [shape = 'u8[131072]{0}', space=vmem, size = 0x20000, scoped, tag = 'input window, operand 3, single buffered']
    #allocation3 [shape = 's32[1]{0}', space=sflag, size = 0x4, scoped, tag = 'scoped memory for tpu_custom_call.1']
    #allocation4 [shape = 's32[1]{0}', space=sflag, size = 0x4, scoped, tag = 'scoped memory for tpu_custom_call.1']
    #allocation5 [shape = 'u8[65536]{0}', space=vmem, size = 0x10000, scoped, tag = 'input window, operand 5, single buffered']
    #allocation6 [shape = 's32[1]{0}', space=sflag, size = 0x4, scoped, tag = 'scoped memory for tpu_custom_call.1']
    #allocation7 [shape = 'u8[1024]{0}', space=vmem, size = 0x400, scoped, tag = 'output window, operand 0, single buffered']
    %12 = vsyncpa [#allocation3], 0
    %13 = vsyncpa [#allocation6], 0
    %14 = vsyncpa [#allocation4], 0
    // Predicated region
    $region2: #{tpu_custom_call.1} parent=1 // pred_check
      _
    $region3: #{tpu_custom_call.1} parent=1 // pred_check_branch
      %16 = sbr.rel (0) target = $region5
    $region4: #{tpu_custom_call.1} parent=1 // pred_region
      _
    $region5: #{tpu_custom_call.1} parent=1 // pred_fallthru
      _
    // Predicated region
    $region6: #{tpu_custom_call.1} parent=1 // pred_check
      _
    $region7: #{tpu_custom_call.1} parent=1 // pred_check_branch
      %18 = sbr.rel (0) target = $region9
    $region8: #{tpu_custom_call.1} parent=1 // pred_region
      _
    $region9: #{tpu_custom_call.1} parent=1 // pred_fallthru
      _
    // Predicated region
    $region10: #{tpu_custom_call.1} parent=1 // pred_check
      _
    $region11: #{tpu_custom_call.1} parent=1 // pred_check_branch
      %20 = sbr.rel (0) target = $region13
    $region12: #{tpu_custom_call.1} parent=1 // pred_region
      _
    $region13: #{tpu_custom_call.1} parent=1 // pred_fallthru
      _
    // Predicated region
    $region14: #{tpu_custom_call.1} parent=1 // pred_check
      _
    $region15: #{tpu_custom_call.1} parent=1 // pred_check_branch
      %22 = sbr.rel (0) target = $region17
    $region16: #{tpu_custom_call.1} parent=1 // pred_region
      %s24 = ssub.s32 4096, 4096
      %25 = vsyncadd [#allocation3], %s24
      %s26 = sshll.u32 [#allocation2], 4
      %s27 = int_to_ptr.vmem [resolvable:$true] %s26
      %32 = dma.hbm_to_vmem [thread:$0]  %s3, 4096, %s27, [#allocation3], 128, 128, 8
    $region17: #{tpu_custom_call.1} parent=1 // pred_fallthru
      _
    // Predicated region
    $region18: #{tpu_custom_call.1} parent=1 // pred_check
      _
    $region19: #{tpu_custom_call.1} parent=1 // pred_check_branch
      %34 = sbr.rel (0) target = $region21
    $region20: #{tpu_custom_call.1} parent=1 // pred_region
      _
    $region21: #{tpu_custom_call.1} parent=1 // pred_fallthru
      _
    // Predicated region
    $region22: #{tpu_custom_call.1} parent=1 // pred_check
      _
    $region23: #{tpu_custom_call.1} parent=1 // pred_check_branch
      %36 = sbr.rel (0) target = $region25
    $region24: #{tpu_custom_call.1} parent=1 // pred_region
      %s38 = ssub.s32 2048, 2048
      %39 = vsyncadd [#allocation6], %s38
      %s40 = sshll.u32 [#allocation5], 4
      %s41 = int_to_ptr.vmem [resolvable:$true] %s40
      %46 = dma.hbm_to_vmem [thread:$0]  %s5, 2048, %s41, [#allocation6], 128, 128, 8
    $region25: #{tpu_custom_call.1} parent=1 // pred_fallthru
      _
    // Predicated region
    $region26: #{tpu_custom_call.1} parent=1 // pred_check
      _
    $region27: #{tpu_custom_call.1} parent=1 // pred_check_branch
      %48 = sbr.rel (0) target = $region29
    $region28: #{tpu_custom_call.1} parent=1 // pred_region
      _
    $region29: #{tpu_custom_call.1} parent=1 // pred_fallthru
      _
    // Predicated region
    $region30: #{tpu_custom_call.1} parent=1 // pred_check
      _
    $region31: #{tpu_custom_call.1} parent=1 // pred_check_branch
      %50 = sbr.rel (0) target = $region33
    $region32: #{tpu_custom_call.1} parent=1 // pred_region
      %51 = dma.done [#allocation3], 4096
    $region33: #{tpu_custom_call.1} parent=1 // pred_fallthru
      _
    // Predicated region
    $region34: #{tpu_custom_call.1} parent=1 // pred_check
      _
    $region35: #{tpu_custom_call.1} parent=1 // pred_check_branch
      %53 = sbr.rel (0) target = $region37
    $region36: #{tpu_custom_call.1} parent=1 // pred_region
      %54 = dma.done [#allocation6], 2048
    $region37: #{tpu_custom_call.1} parent=1 // pred_fallthru
      _
    %v55 = vld [vmem:[%s0] sm:$0xff]
    %v56 = vld [vmem:[%s0 + $0x8] sm:$0xff]
    %v57 = vld [vmem:[%s0 + $0x10] sm:$0xff]
    %v58 = vld [vmem:[%s0 + $0x18] sm:$0xff]
    %vm59 = vcmask 23552
    %v60 = vsel %vm59, %v55, 0.0
    %v61 = vsel %vm59, %v56, 0.0
    %v62 = vadd.f32 %v60, %v61
    %v63 = vrot.slane %v62, 4
    %v64 = vadd.f32 %v62, %v63
    %v65 = vrot.slane %v64, 2
    %v66 = vadd.f32 %v64, %v65
    %v67 = vrot.slane %v66, 1
    %v68 = vadd.f32 %v66, %v67
    %v69 = vsel %vm59, %v57, 0.0
    %v70 = vsel %vm59, %v58, 0.0
    %v71 = vadd.f32 %v69, %v70
    %v72 = vrot.slane %v71, 4
    %v73 = vadd.f32 %v71, %v72
    %v74 = vrot.slane %v73, 2
    %v75 = vadd.f32 %v73, %v74
    %v76 = vrot.slane %v75, 1
    %v77 = vadd.f32 %v75, %v76
    %v78 = vrcp.pop 16.0
    %v79 = vmul.f32 %v68, %v78
    %v80 = vmul.f32 %v77, %v78
    %v81 = vld [vmem:[%s1] sm:$0x77]
    %v82 = vld [vmem:[%s2] sm:$0x3]
    %v84 = vlaneseq
    %v85 = vshrl.u32 %v84, 7
    %v86 = vsub.s32 0, %v85
    %v87 = vrot.slane %v82, %v86
    %v88 = vlaneseq
    %v89 = vshrl.u32 %v88, 7
    %v90 = vsub.s32 1, %v89
    %v91 = vrot.slane %v82, %v90
    %vm96 = vcmask 1041409
    %v97 = vsel %vm96, %v80, %v79
    %v99 = vcombine.high %v81, %v81
    %v100 = vsel %vm59, %v97, 0
    %vm102 = vcmask 1042432
    %v103 = vsel %vm102, %v81, 0
    %v105 = vsel %vm102, %v99, 0
    %107 = vmatprep.subr.mxu0 %v105
    %108 = vmatpush1.msra.mxu0 %v103
    %109 = vmatprep.subr.mxu0 0.0
    %110 = vmatpush1.msra.mxu0 0.0
    %111 = vmatprep.subr.mxu0 0.0
    %112 = vmatpush1.msra.mxu0 0.0
    %113 = vmatprep.subr.mxu0 0.0
    %114 = vmatpush1.msra.mxu0 0.0
    %115 = vmatprep.subr.mxu0 0.0
    %116 = vmatpush1.msra.mxu0 0.0
    %117 = vmatprep.subr.mxu0 0.0
    %118 = vmatpush1.msra.mxu0 0.0
    %119 = vmatprep.subr.mxu0 0.0
    %120 = vmatpush1.msra.mxu0 0.0
    %121 = vmatprep.subr.mxu0 0.0
    %122 = vmatpush1.msra.mxu0 0.0
    %123 = vmatprep.subr.mxu0 0.0
    %124 = vmatpush1.msra.mxu0 0.0
    %125 = vmatprep.subr.mxu0 0.0
    %126 = vmatpush1.msra.mxu0 0.0
    %127 = vmatprep.subr.mxu0 0.0
    %128 = vmatpush1.msra.mxu0 0.0
    %129 = vmatprep.subr.mxu0 0.0
    %130 = vmatpush1.msra.mxu0 0.0
    %131 = vmatprep.subr.mxu0 0.0
    %132 = vmatpush1.msra.mxu0 0.0
    %133 = vmatprep.subr.mxu0 0.0
    %134 = vmatpush1.msra.mxu0 0.0
    %135 = vmatprep.subr.mxu0 0.0
    %136 = vmatpush1.msra.mxu0 0.0
    %137 = vmatprep.subr.mxu0 0.0
    %138 = vmatpush1.msra.mxu0 0.0
    %139 = vmatprep.subr.mxu0 0.0
    %140 = vmatpush1.msra.mxu0 0.0
    %141 = vmatprep.subr.mxu0 0.0
    %142 = vmatpush1.msra.mxu0 0.0
    %143 = vmatprep.subr.mxu0 0.0
    %144 = vmatpush1.msra.mxu0 0.0
    %145 = vmatprep.subr.mxu0 0.0
    %146 = vmatpush1.msra.mxu0 0.0
    %147 = vmatprep.subr.mxu0 0.0
    %148 = vmatpush1.msra.mxu0 0.0
    %149 = vmatprep.subr.mxu0 0.0
    %150 = vmatpush1.msra.mxu0 0.0
    %151 = vmatprep.subr.mxu0 0.0
    %152 = vmatpush1.msra.mxu0 0.0
    %153 = vmatprep.subr.mxu0 0.0
    %154 = vmatpush1.msra.mxu0 0.0
    %155 = vmatprep.subr.mxu0 0.0
    %156 = vmatpush1.msra.mxu0 0.0
    %157 = vmatprep.subr.mxu0 0.0
    %158 = vmatpush1.msra.mxu0 0.0
    %159 = vmatprep.subr.mxu0 0.0
    %160 = vmatpush1.msra.mxu0 0.0
    %161 = vmatprep.subr.mxu0 0.0
    %162 = vmatpush1.msra.mxu0 0.0
    %163 = vmatprep.subr.mxu0 0.0
    %164 = vmatpush1.msra.mxu0 0.0
    %165 = vmatprep.subr.mxu0 0.0
    %166 = vmatpush1.msra.mxu0 0.0
    %167 = vmatprep.subr.mxu0 0.0
    %168 = vmatpush1.msra.mxu0 0.0
    %169 = vmatprep.subr.mxu0 0.0
    %170 = vmatpush1.msra.mxu0 0.0
    %171 = vmatprep.mubr.f32.mxu0 0.0
    %172 = vmatmul.mubr.f32.gmra.mrb[0].mxu0 %v100
    %v173 = vpop.f32.mrb[0].mxu0
    %v174 = vadd.f32 %v87, %v173
    %v175 = vpop.f32.mrb[0].mxu0
    %v176 = vadd.f32 %v91, %v175
    %177 = vdwg.mxu0
    %v178 = vld [vmem:[#allocation2] sm:$0xff]
    %v179 = vld [vmem:[#allocation2 + $0x8] sm:$0xff]
    %v180 = vld [vmem:[#allocation2 + $0x10] sm:$0xff]
    %v181 = vld [vmem:[#allocation2 + $0x18] sm:$0xff]
    %v182 = vld [vmem:[#allocation2 + $0x20] sm:$0xff]
    %v183 = vld [vmem:[#allocation2 + $0x28] sm:$0xff]
    %v184 = vld [vmem:[#allocation2 + $0x30] sm:$0xff]
    %v185 = vld [vmem:[#allocation2 + $0x38] sm:$0xff]
    %v186 = vld [vmem:[#allocation2 + $0x40] sm:$0xff]
    %v187 = vld [vmem:[#allocation2 + $0x48] sm:$0xff]
    %v188 = vld [vmem:[#allocation2 + $0x50] sm:$0xff]
    %v189 = vld [vmem:[#allocation2 + $0x58] sm:$0xff]
    %v190 = vld [vmem:[#allocation2 + $0x60] sm:$0xff]
    %v191 = vld [vmem:[#allocation2 + $0x68] sm:$0xff]
    %v192 = vld [vmem:[#allocation2 + $0x70] sm:$0xff]
    %v193 = vld [vmem:[#allocation2 + $0x78] sm:$0xff]
    %v194 = vld [vmem:[#allocation2 + $0x80] sm:$0xff]
    %v195 = vld [vmem:[#allocation2 + $0x88] sm:$0xff]
    %v196 = vld [vmem:[#allocation2 + $0x90] sm:$0xff]
    %v197 = vld [vmem:[#allocation2 + $0x98] sm:$0xff]
    %v198 = vld [vmem:[#allocation2 + $0xa0] sm:$0xff]
    %v199 = vld [vmem:[#allocation2 + $0xa8] sm:$0xff]
    %v200 = vld [vmem:[#allocation2 + $0xb0] sm:$0xff]
    %v201 = vld [vmem:[#allocation2 + $0xb8] sm:$0xff]
    %v202 = vld [vmem:[#allocation2 + $0xc0] sm:$0xff]
    %v203 = vld [vmem:[#allocation2 + $0xc8] sm:$0xff]
    %v204 = vld [vmem:[#allocation2 + $0xd0] sm:$0xff]
    %v205 = vld [vmem:[#allocation2 + $0xd8] sm:$0xff]
    %v206 = vld [vmem:[#allocation2 + $0xe0] sm:$0xff]
    %v207 = vld [vmem:[#allocation2 + $0xe8] sm:$0xff]
    %v208 = vld [vmem:[#allocation2 + $0xf0] sm:$0xff]
    %v209 = vld [vmem:[#allocation2 + $0xf8] sm:$0xff]
    %v210 = vld [vmem:[%s4] sm:$0x1]
    %v212 = vlaneseq
    %v213 = vshrl.u32 %v212, 7
    %v214 = vsub.s32 0, %v213
    %v215 = vrot.slane %v210, %v214
    %217 = vmatprep.subr.mxu0 0.0
    %218 = vmatpush1.msra.mxu0 %v178
    %219 = vmatprep.subr.mxu0 0.0
    %220 = vmatpush1.msra.mxu0 %v179
    %221 = vmatprep.subr.mxu0 0.0
    %222 = vmatpush1.msra.mxu0 %v180
    %223 = vmatprep.subr.mxu0 0.0
    %224 = vmatpush1.msra.mxu0 %v181
    %225 = vmatprep.subr.mxu0 0.0
    %226 = vmatpush1.msra.mxu0 %v182
    %227 = vmatprep.subr.mxu0 0.0
    %228 = vmatpush1.msra.mxu0 %v183
    %229 = vmatprep.subr.mxu0 0.0
    %230 = vmatpush1.msra.mxu0 %v184
    %231 = vmatprep.subr.mxu0 0.0
    %232 = vmatpush1.msra.mxu0 %v185
    %233 = vmatprep.subr.mxu0 0.0
    %234 = vmatpush1.msra.mxu0 %v186
    %235 = vmatprep.subr.mxu0 0.0
    %236 = vmatpush1.msra.mxu0 %v187
    %237 = vmatprep.subr.mxu0 0.0
    %238 = vmatpush1.msra.mxu0 %v188
    %239 = vmatprep.subr.mxu0 0.0
    %240 = vmatpush1.msra.mxu0 %v189
    %241 = vmatprep.subr.mxu0 0.0
    %242 = vmatpush1.msra.mxu0 %v190
    %243 = vmatprep.subr.mxu0 0.0
    %244 = vmatpush1.msra.mxu0 %v191
    %245 = vmatprep.subr.mxu0 0.0
    %246 = vmatpush1.msra.mxu0 %v192
    %247 = vmatprep.subr.mxu0 0.0
    %248 = vmatpush1.msra.mxu0 %v193
    %249 = vmatprep.subr.mxu0 0.0
    %250 = vmatpush1.msra.mxu0 %v194
    %251 = vmatprep.subr.mxu0 0.0
    %252 = vmatpush1.msra.mxu0 %v195
    %253 = vmatprep.subr.mxu0 0.0
    %254 = vmatpush1.msra.mxu0 %v196
    %255 = vmatprep.subr.mxu0 0.0
    %256 = vmatpush1.msra.mxu0 %v197
    %257 = vmatprep.subr.mxu0 0.0
    %258 = vmatpush1.msra.mxu0 %v198
    %259 = vmatprep.subr.mxu0 0.0
    %260 = vmatpush1.msra.mxu0 %v199
    %261 = vmatprep.subr.mxu0 0.0
    %262 = vmatpush1.msra.mxu0 %v200
    %263 = vmatprep.subr.mxu0 0.0
    %264 = vmatpush1.msra.mxu0 %v201
    %265 = vmatprep.subr.mxu0 0.0
    %266 = vmatpush1.msra.mxu0 %v202
    %267 = vmatprep.subr.mxu0 0.0
    %268 = vmatpush1.msra.mxu0 %v203
    %269 = vmatprep.subr.mxu0 0.0
    %270 = vmatpush1.msra.mxu0 %v204
    %271 = vmatprep.subr.mxu0 0.0
    %272 = vmatpush1.msra.mxu0 %v205
    %273 = vmatprep.subr.mxu0 0.0
    %274 = vmatpush1.msra.mxu0 %v206
    %275 = vmatprep.subr.mxu0 0.0
    %276 = vmatpush1.msra.mxu0 %v207
    %277 = vmatprep.subr.mxu0 0.0
    %278 = vmatpush1.msra.mxu0 %v208
    %279 = vmatprep.subr.mxu0 0.0
    %280 = vmatpush1.msra.mxu0 %v209
    %281 = vmatprep.mubr.f32.mxu0 %v176
    %282 = vmatmul.mubr.f32.gmra.mrb[0].mxu0 %v174
    %v283 = vpop.f32.mrb[0].mxu0
    %v284 = vadd.f32 %v215, %v283
    %v285 = vpop.f32.mrb[0].mxu0
    %286 = vdwg.mxu0
    %v287 = vmax.f32 %v284, 0.0
    %v288 = vld [vmem:[#allocation5] sm:$0xff]
    %v289 = vld [vmem:[#allocation5 + $0x8] sm:$0xff]
    %v290 = vld [vmem:[#allocation5 + $0x10] sm:$0xff]
    %v291 = vld [vmem:[#allocation5 + $0x18] sm:$0xff]
    %v292 = vld [vmem:[#allocation5 + $0x20] sm:$0xff]
    %v293 = vld [vmem:[#allocation5 + $0x28] sm:$0xff]
    %v294 = vld [vmem:[#allocation5 + $0x30] sm:$0xff]
    %v295 = vld [vmem:[#allocation5 + $0x38] sm:$0xff]
    %v296 = vld [vmem:[#allocation5 + $0x40] sm:$0xff]
    %v297 = vld [vmem:[#allocation5 + $0x48] sm:$0xff]
    %v298 = vld [vmem:[#allocation5 + $0x50] sm:$0xff]
    %v299 = vld [vmem:[#allocation5 + $0x58] sm:$0xff]
    %v300 = vld [vmem:[#allocation5 + $0x60] sm:$0xff]
    %v301 = vld [vmem:[#allocation5 + $0x68] sm:$0xff]
    %v302 = vld [vmem:[#allocation5 + $0x70] sm:$0xff]
    %v303 = vld [vmem:[#allocation5 + $0x78] sm:$0xff]
    %v304 = vld [vmem:[%s6] sm:$0x1]
    %v306 = vlaneseq
    %v307 = vshrl.u32 %v306, 7
    %v308 = vsub.s32 0, %v307
    %v309 = vrot.slane %v304, %v308
    %311 = vmatprep.subr.mxu0 0.0
    %312 = vmatpush1.msra.mxu0 %v288
    %313 = vmatprep.subr.mxu0 0.0
    %314 = vmatpush1.msra.mxu0 %v289
    %315 = vmatprep.subr.mxu0 0.0
    %316 = vmatpush1.msra.mxu0 %v290
    %317 = vmatprep.subr.mxu0 0.0
    %318 = vmatpush1.msra.mxu0 %v291
    %319 = vmatprep.subr.mxu0 0.0
    %320 = vmatpush1.msra.mxu0 %v292
    %321 = vmatprep.subr.mxu0 0.0
    %322 = vmatpush1.msra.mxu0 %v293
    %323 = vmatprep.subr.mxu0 0.0
    %324 = vmatpush1.msra.mxu0 %v294
    %325 = vmatprep.subr.mxu0 0.0
    %326 = vmatpush1.msra.mxu0 %v295
    %327 = vmatprep.subr.mxu0 0.0
    %328 = vmatpush1.msra.mxu0 %v296
    %329 = vmatprep.subr.mxu0 0.0
    %330 = vmatpush1.msra.mxu0 %v297
    %331 = vmatprep.subr.mxu0 0.0
    %332 = vmatpush1.msra.mxu0 %v298
    %333 = vmatprep.subr.mxu0 0.0
    %334 = vmatpush1.msra.mxu0 %v299
    %335 = vmatprep.subr.mxu0 0.0
    %336 = vmatpush1.msra.mxu0 %v300
    %337 = vmatprep.subr.mxu0 0.0
    %338 = vmatpush1.msra.mxu0 %v301
    %339 = vmatprep.subr.mxu0 0.0
    %340 = vmatpush1.msra.mxu0 %v302
    %341 = vmatprep.subr.mxu0 0.0
    %342 = vmatpush1.msra.mxu0 %v303
    %343 = vmatprep.subr.mxu0 0.0
    %344 = vmatpush1.msra.mxu0 0.0
    %345 = vmatprep.subr.mxu0 0.0
    %346 = vmatpush1.msra.mxu0 0.0
    %347 = vmatprep.subr.mxu0 0.0
    %348 = vmatpush1.msra.mxu0 0.0
    %349 = vmatprep.subr.mxu0 0.0
    %350 = vmatpush1.msra.mxu0 0.0
    %351 = vmatprep.subr.mxu0 0.0
    %352 = vmatpush1.msra.mxu0 0.0
    %353 = vmatprep.subr.mxu0 0.0
    %354 = vmatpush1.msra.mxu0 0.0
    %355 = vmatprep.subr.mxu0 0.0
    %356 = vmatpush1.msra.mxu0 0.0
    %357 = vmatprep.subr.mxu0 0.0
    %358 = vmatpush1.msra.mxu0 0.0
    %359 = vmatprep.subr.mxu0 0.0
    %360 = vmatpush1.msra.mxu0 0.0
    %361 = vmatprep.subr.mxu0 0.0
    %362 = vmatpush1.msra.mxu0 0.0
    %363 = vmatprep.subr.mxu0 0.0
    %364 = vmatpush1.msra.mxu0 0.0
    %365 = vmatprep.subr.mxu0 0.0
    %366 = vmatpush1.msra.mxu0 0.0
    %367 = vmatprep.subr.mxu0 0.0
    %368 = vmatpush1.msra.mxu0 0.0
    %369 = vmatprep.subr.mxu0 0.0
    %370 = vmatpush1.msra.mxu0 0.0
    %371 = vmatprep.subr.mxu0 0.0
    %372 = vmatpush1.msra.mxu0 0.0
    %373 = vmatprep.subr.mxu0 0.0
    %374 = vmatpush1.msra.mxu0 0.0
    %375 = vmatprep.mubr.f32.mxu0 0.0
    %376 = vmatmul.mubr.f32.gmra.mrb[0].mxu0 %v287
    %v377 = vpop.f32.mrb[0].mxu0
    %v378 = vadd.f32 %v309, %v377
    %v379 = vpop.f32.mrb[0].mxu0
    %380 = vdwg.mxu0
    %381 = vst [vmem:[#allocation7] sm:$0x3] %v378
    // Predicated region
    $region38: #{tpu_custom_call.1} parent=1 // pred_check
      _
    $region39: #{tpu_custom_call.1} parent=1 // pred_check_branch
      %383 = sbr.rel (0) target = $region41
    $region40: #{tpu_custom_call.1} parent=1 // pred_region
      %s385 = ssub.s32 32, 32
      %386 = vsyncadd [#allocation4], %s385
      %s388 = sshll.u32 [#allocation7], 4
      %s389 = int_to_ptr.vmem [resolvable:$true] %s388
      %391 = dma.vmem_to_hbm [thread:$0]  %s389, 32, %s7, [#allocation4]
    $region41: #{tpu_custom_call.1} parent=1 // pred_fallthru
      _
    // Predicated region
    $region42: #{tpu_custom_call.1} parent=1 // pred_check
      _
    $region43: #{tpu_custom_call.1} parent=1 // pred_check_branch
      %393 = sbr.rel (0) target = $region45
    $region44: #{tpu_custom_call.1} parent=1 // pred_region
      %394 = dma.done [#allocation4], 32
    $region45: #{tpu_custom_call.1} parent=1 // pred_fallthru
      _
    %395 = vsyncpa [#allocation3], 1
    %396 = vsyncpa [#allocation6], 1
    %397 = vsyncpa [#allocation4], 1

</llo_original>
